<compile_context>
chip_gen: v7x
topology: tpu7x:2x2x1
jax: 0.10.0
libtpu: 0.0.40
codegen_flags: <defaults>
</compile_context>

<pallas_src>
import functools

import jax
import jax.numpy as jnp
from jax import lax
from jax.experimental import pallas as pl
from jax.experimental.pallas import tpu as pltpu


def _spectral_am_kernel(x_ref, w_ref, b_ref, o_ref):
    """One batch tile: grouped full-spatial conv (as one MXU matmul) + channel softmax.

    x_ref: [TILE_N, KDIM]   input tile, native dtype (KDIM = C_in*HW padded to 128)
    w_ref: [KDIM, C_out]    block-diagonal grouped-conv weights (resident)
    b_ref: [1, C_out]       bias, float32 (resident)
    o_ref: [TILE_N, C_out]  float32 softmax output
    """
    # Single MXU contraction over the (padded) channel*spatial axis; f32 accumulation.
    y = lax.dot_general(
        x_ref[...], w_ref[...],
        dimension_numbers=(((1,), (0,)), ((), ())),
        preferred_element_type=jnp.float32,
    ) + b_ref[...]                                        # [TILE_N, C_out]

    # Softmax over the output-channel axis (dim=1 in the PyTorch module).
    m = jnp.max(y, axis=1, keepdims=True)
    e = jnp.exp(y - m)
    denom = jnp.sum(e, axis=1, keepdims=True)
    o_ref[...] = (e / denom).astype(o_ref.dtype)          # exact divide: rows sum to 1


def _round_up(v, m):
    return ((v + m - 1) // m) * m


def _vmem_capacity_bytes():
    """Per-core VMEM capacity, with a conservative fallback (v7x: 64 MiB)."""
    try:
        return int(pltpu.get_tpu_info().vmem_capacity_bytes)
    except Exception:
        return 64 << 20


def spectral_am_forward(x, weight, bias, *, tile_n=None):
    """x: [N, C_in, H, W] (NCHW); weight: [C_out, 1, H, W]; bias: [C_out].

    Returns [N, C_out, 1, 1] float32 (softmax over the channel axis), matching PyTorch.
    """
    N, C_in, H, W = x.shape
    C_out = weight.shape[0]
    assert C_out % C_in == 0, "groups=input_c requires output_c % input_c == 0"
    K = C_out // C_in
    HW = H * W
    kdim = C_in * HW

    # ---- Wrapper-side layout prep (paid once, outside the grid loop). -------------
    # Flatten x (free, contiguous reshape; keep native dtype -- no up-cast, no repeat).
    x2 = x.reshape(N, kdim)

    # Block-diagonal grouped-conv weight: W_bd[c*HW + s, oc] = weight[oc, 0, s] iff oc//K == c.
    w_flat = weight.reshape(C_out, HW).astype(x.dtype)                    # [C_out, HW]
    group_of_oc = jnp.arange(C_out) // K                                  # [C_out]
    sel = (jnp.arange(C_in)[:, None] == group_of_oc[None, :])             # [C_in, C_out]
    w_bd = (w_flat.T[None, :, :] * sel[:, None, :].astype(w_flat.dtype))  # [C_in, HW, C_out]
    w_bd = w_bd.reshape(kdim, C_out)

    # Pad the contraction axis to a multiple of 128 so lane tiles are fully aligned.
    kdim_p = _round_up(kdim, 128)
    if kdim_p != kdim:
        x2 = jnp.pad(x2, ((0, 0), (0, kdim_p - kdim)))
        w_bd = jnp.pad(w_bd, ((0, kdim_p - kdim), (0, 0)))

    b2 = bias.reshape(1, C_out).astype(jnp.float32)

    # ---- VMEM-aware tile selection. ------------------------------------------------
    itemsize = x2.dtype.itemsize
    x_row_bytes = kdim_p * itemsize
    out_row_bytes = _round_up(C_out, 128) * 4                              # lane-padded f32
    w_bytes = _round_up(kdim_p, 8) * _round_up(C_out, 128) * itemsize      # padded layout
    b_bytes = 8 * _round_up(C_out, 128) * 4

    vmem_cap = _vmem_capacity_bytes()
    if tile_n is None:
        # Budget: ~75% of VMEM, minus double-buffered resident weight/bias + headroom.
        budget = int(vmem_cap * 0.75) - 2 * (w_bytes + b_bytes) - (2 << 20)
        per_row = 2 * (x_row_bytes + out_row_bytes)                        # double-buffered
        max_rows = max(8, budget // max(per_row, 1))
        target_rows = max(8, (8 << 20) // max(x_row_bytes, 1))             # ~8 MiB of x/step
        tile_n = min(max_rows, target_rows, 2048)
        tile_n = max(8, (tile_n // 8) * 8)
        # Keep >= 2 grid steps when possible so v7x megacore can use both TensorCores.
        if N > 8:
            tile_n = min(tile_n, _round_up(pl.cdiv(N, 2), 8))
    if N <= tile_n:
        tile_n = N                                                          # full-dim block
    grid = (pl.cdiv(N, tile_n),)

    vmem_need = (2 * tile_n * (x_row_bytes + out_row_bytes)
                 + 2 * (w_bytes + b_bytes) + (2 << 20))
    vmem_limit = int(min(max(vmem_need, 32 << 20), int(vmem_cap * 0.85)))

    cost = pl.CostEstimate(
        flops=2 * N * C_out * HW,
        transcendentals=N * C_out,
        bytes_accessed=(x2.size * itemsize + w_bd.size * itemsize
                        + b2.size * 4 + N * C_out * 4),
    )

    out = pl.pallas_call(
        _spectral_am_kernel,
        out_shape=jax.ShapeDtypeStruct((N, C_out), jnp.float32),
        grid=grid,
        in_specs=[
            pl.BlockSpec((tile_n, kdim_p), lambda i: (i, 0)),     # pipelined over batch
            pl.BlockSpec((kdim_p, C_out), lambda i: (0, 0)),      # resident block-diag weights
            pl.BlockSpec((1, C_out), lambda i: (0, 0)),           # resident bias
        ],
        out_specs=pl.BlockSpec((tile_n, C_out), lambda i: (i, 0)),
        compiler_params=pltpu.CompilerParams(
            dimension_semantics=("parallel",),
            vmem_limit_bytes=vmem_limit,
        ),
        cost_estimate=cost,
    )(x2, w_bd, b2)

    # Match PyTorch output shape: [N, C_out, 1, 1]
    return out.reshape(N, C_out, 1, 1)


def _reference(x, weight, bias):
    """Pure-JAX reference of the grouped full-spatial conv + channel softmax."""
    N, C_in, H, W = x.shape
    C_out = weight.shape[0]
    K = C_out // C_in
    x_exp = jnp.repeat(x.reshape(N, C_in, H * W).astype(jnp.float32), K, axis=1)
    w = weight.reshape(C_out, H * W).astype(jnp.float32)
    y = jnp.einsum("ncs,cs->nc", x_exp, w) + bias[None, :]
    return jax.nn.softmax(y, axis=1).reshape(N, C_out, 1, 1)


if __name__ == "__main__":
    # Small shapes consistent with the module: batch=2, input_c=4, output_c=8, H=W=16.
    N, C_in, C_out, H, W = 2, 4, 8, 16, 16

    key = jax.random.PRNGKey(0)
    kx, kw, kb = jax.random.split(key, 3)

    x = jax.random.normal(kx, (N, C_in, H, W), dtype=jnp.float32)
    # Conv2d weight shape with groups=input_c: [C_out, 1, H, W]; uniform(-1/sqrt(fan_in), ...)
    fan_in = H * W
    bound = 1.0 / (fan_in ** 0.5)
    weight = jax.random.uniform(kw, (C_out, 1, H, W), jnp.float32, -bound, bound)
    bias = jax.random.uniform(kb, (C_out,), jnp.float32, -bound, bound)

    out = spectral_am_forward(x, weight, bias)
    out = jax.block_until_ready(out)

    ref = _reference(x, weight, bias)
    assert out.shape == (N, C_out, 1, 1)
    # MXU-accumulated matmul vs VPU einsum reference: small numerical slack.
    assert jnp.allclose(out, ref, atol=1e-3, rtol=1e-3), "mismatch vs reference"
    # Exact divide in the epilogue -> rows sum to 1 up to fp rounding.
    assert jnp.allclose(jnp.sum(out, axis=1), 1.0, atol=1e-5), "softmax rows must sum to 1"

    print("KERNEL_OK")
</pallas_src>

<mosaic_0001>
module attributes {stable_mosaic.version = 11 : i64} {
  func.func @_spectral_am_kernel(%arg0: i32, %arg1: memref<2x1024xf32, #tpu.memory_space<vmem>>, %arg2: memref<1024x8xf32, #tpu.memory_space<vmem>>, %arg3: memref<1x8xf32, #tpu.memory_space<vmem>>, %arg4: memref<2x8xf32, #tpu.memory_space<vmem>>) attributes {dimension_semantics = [#tpu.dimension_semantics<parallel>], iteration_bounds = array<i64: 1>, scalar_prefetch = 0 : i64, scratch_operands = 0 : i64, tpu.core_type = #tpu.core_type<tc>, window_params = [{transform_indices = @transform_0, window_bounds = array<i64: 2, 1024>}, {pipeline_mode = #tpu.pipeline_mode<synchronous>, transform_indices = @transform_1, window_bounds = array<i64: 1024, 8>}, {pipeline_mode = #tpu.pipeline_mode<synchronous>, transform_indices = @transform_2, window_bounds = array<i64: 1, 8>}, {transform_indices = @transform_3, window_bounds = array<i64: 2, 8>}]} {
    %c0 = arith.constant 0 : index
    %c0_0 = arith.constant 0 : index
    %0 = vector.load %arg1[%c0, %c0_0] : memref<2x1024xf32, #tpu.memory_space<vmem>>, vector<2x1024xf32>
    %c0_1 = arith.constant 0 : index
    %c0_2 = arith.constant 0 : index
    %1 = vector.load %arg2[%c0_1, %c0_2] : memref<1024x8xf32, #tpu.memory_space<vmem>>, vector<1024x8xf32>
    %cst = arith.constant dense<0.000000e+00> : vector<2x8xf32>
    %2 = tpu.matmul %0, %1, %cst {dimension_numbers = #tpu.dot_dimension_numbers<[1], [0], [0], [1], [0, 0, 1, 1], [], []>} : vector<2x1024xf32>, vector<1024x8xf32>, vector<2x8xf32> -> vector<2x8xf32>
    %c0_3 = arith.constant 0 : index
    %c0_4 = arith.constant 0 : index
    %3 = vector.load %arg3[%c0_3, %c0_4] : memref<1x8xf32, #tpu.memory_space<vmem>>, vector<1x8xf32>
    %4 = vector.broadcast %3 : vector<1x8xf32> to vector<2x8xf32>
    %5 = arith.addf %2, %4 : vector<2x8xf32>
    %cst_5 = arith.constant dense<0xFF800000> : vector<2xf32>
    %6 = vector.multi_reduction <maximumf>, %5, %cst_5 [1] : vector<2x8xf32> to vector<2xf32>
    %7 = vector.shape_cast %6 : vector<2xf32> to vector<2x1xf32>
    %8 = vector.broadcast %7 : vector<2x1xf32> to vector<2x8xf32>
    %9 = arith.subf %5, %8 : vector<2x8xf32>
    %10 = math.exp %9 : vector<2x8xf32>
    %cst_6 = arith.constant dense<0.000000e+00> : vector<2xf32>
    %11 = vector.multi_reduction <add>, %10, %cst_6 [1] : vector<2x8xf32> to vector<2xf32>
    %12 = vector.shape_cast %11 : vector<2xf32> to vector<2x1xf32>
    %13 = vector.broadcast %12 : vector<2x1xf32> to vector<2x8xf32>
    %14 = arith.divf %10, %13 : vector<2x8xf32>
    %c0_7 = arith.constant 0 : index
    %c0_8 = arith.constant 0 : index
    %15 = vector.load %arg4[%c0_7, %c0_8] : memref<2x8xf32, #tpu.memory_space<vmem>>, vector<2x8xf32>
    tpu.vector_store %arg4[%c0_7, %c0_8], %14 {strides = array<i32>} : memref<2x8xf32, #tpu.memory_space<vmem>>, vector<2x8xf32>,
    return
  }
  func.func @transform_0(%arg0: i32) -> (i32, i32) {
    %c0_i32 = arith.constant 0 : i32
    %c0_i32_0 = arith.constant 0 : i32
    return %arg0, %c0_i32 : i32, i32
  }
  func.func @transform_1(%arg0: i32) -> (i32, i32) {
    %c0_i32 = arith.constant 0 : i32
    %c0_i32_0 = arith.constant 0 : i32
    %c0_i32_1 = arith.constant 0 : i32
    return %c0_i32, %c0_i32_0 : i32, i32
  }
  func.func @transform_2(%arg0: i32) -> (i32, i32) {
    %c0_i32 = arith.constant 0 : i32
    %c0_i32_0 = arith.constant 0 : i32
    %c0_i32_1 = arith.constant 0 : i32
    return %c0_i32, %c0_i32_0 : i32, i32
  }
  func.func @transform_3(%arg0: i32) -> (i32, i32) {
    %c0_i32 = arith.constant 0 : i32
    %c0_i32_0 = arith.constant 0 : i32
    return %arg0, %c0_i32 : i32, i32
  }
}

</mosaic_0001>

<llo_original>
// kernel: tpu_custom_call.1
$region0: #{tpu_custom_call.1}
  #allocation0 [shape = 'u32[]', space=smem, size = 0x4, offset = 0x4, fixed_abs, tag = 'smem constant byte address 0x4 - core index']
  #allocation1 [shape = 'u32[144,128]{1,0:T(1,128)}', space=vmem, size = 0x12000, scoped, tag = 'internal scratch']
  %s0 = inlined_call_operand.vmem [shape: f32[2,1024], index: 0, kind: input, shape index: {}]
  %s1 = inlined_call_operand.vmem [shape: f32[1024,8], index: 1, kind: input, shape index: {}]
  %s2 = inlined_call_operand.vmem [shape: f32[1,8], index: 2, kind: input, shape index: {}]
  %s3 = inlined_call_operand.hbm [shape: f32[2,8], index: 3, kind: output, shape index: {}]
  %s4 = sld [smem:[#allocation0]]
  $region22: #{tpu_custom_call.1} parent=0
    _
  %s6 = ssub.s32 1, %s4
  %s7 = scalar_select 0, %s6, %s4
  $region1: #{tpu_custom_call.1} parent=0
    #allocation2 [shape = 'u8[1024]{0}', space=vmem, size = 0x400, scoped, tag = 'output window, operand 0, single buffered']
    #allocation3 [shape = 's32[1]{0}', space=sflag, size = 0x4, scoped, tag = 'scoped memory for tpu_custom_call.1']
    %8 = vsyncpa [#allocation3], 0
    // Predicated region
    $region2: #{tpu_custom_call.1} parent=1 // pred_check
      _
    $region3: #{tpu_custom_call.1} parent=1 // pred_check_branch
      %10 = sbr.rel (0) target = $region5
    $region4: #{tpu_custom_call.1} parent=1 // pred_region
      _
    $region5: #{tpu_custom_call.1} parent=1 // pred_fallthru
      _
    // Predicated region
    $region6: #{tpu_custom_call.1} parent=1 // pred_check
      _
    $region7: #{tpu_custom_call.1} parent=1 // pred_check_branch
      %12 = sbr.rel (0) target = $region9
    $region8: #{tpu_custom_call.1} parent=1 // pred_region
      _
    $region9: #{tpu_custom_call.1} parent=1 // pred_fallthru
      _
    // Predicated region
    $region10: #{tpu_custom_call.1} parent=1 // pred_check
      _
    $region11: #{tpu_custom_call.1} parent=1 // pred_check_branch
      %14 = sbr.rel (0) target = $region13
    $region12: #{tpu_custom_call.1} parent=1 // pred_region
      _
    $region13: #{tpu_custom_call.1} parent=1 // pred_fallthru
      _
    %v15 = vld [vmem:[%s0] sm:$0xff]
    %v16 = vld [vmem:[%s0 + $0x8] sm:$0xff]
    %v17 = vld [vmem:[%s1] sm:$0xff]
    %v18 = vld [vmem:[%s1 + $0x8] sm:$0xff]
    %v19 = vld [vmem:[%s1 + $0x10] sm:$0xff]
    %v20 = vld [vmem:[%s1 + $0x18] sm:$0xff]
    %v21 = vld [vmem:[%s1 + $0x20] sm:$0xff]
    %v22 = vld [vmem:[%s1 + $0x28] sm:$0xff]
    %v23 = vld [vmem:[%s1 + $0x30] sm:$0xff]
    %v24 = vld [vmem:[%s1 + $0x38] sm:$0xff]
    %v25 = vld [vmem:[%s1 + $0x40] sm:$0xff]
    %v26 = vld [vmem:[%s1 + $0x48] sm:$0xff]
    %v27 = vld [vmem:[%s1 + $0x50] sm:$0xff]
    %v28 = vld [vmem:[%s1 + $0x58] sm:$0xff]
    %v29 = vld [vmem:[%s1 + $0x60] sm:$0xff]
    %v30 = vld [vmem:[%s1 + $0x68] sm:$0xff]
    %v31 = vld [vmem:[%s1 + $0x70] sm:$0xff]
    %v32 = vld [vmem:[%s1 + $0x78] sm:$0xff]
    %v33 = vld [vmem:[%s1 + $0x80] sm:$0xff]
    %v34 = vld [vmem:[%s1 + $0x88] sm:$0xff]
    %v35 = vld [vmem:[%s1 + $0x90] sm:$0xff]
    %v36 = vld [vmem:[%s1 + $0x98] sm:$0xff]
    %v37 = vld [vmem:[%s1 + $0xa0] sm:$0xff]
    %v38 = vld [vmem:[%s1 + $0xa8] sm:$0xff]
    %v39 = vld [vmem:[%s1 + $0xb0] sm:$0xff]
    %v40 = vld [vmem:[%s1 + $0xb8] sm:$0xff]
    %v41 = vld [vmem:[%s1 + $0xc0] sm:$0xff]
    %v42 = vld [vmem:[%s1 + $0xc8] sm:$0xff]
    %v43 = vld [vmem:[%s1 + $0xd0] sm:$0xff]
    %v44 = vld [vmem:[%s1 + $0xd8] sm:$0xff]
    %v45 = vld [vmem:[%s1 + $0xe0] sm:$0xff]
    %v46 = vld [vmem:[%s1 + $0xe8] sm:$0xff]
    %v47 = vld [vmem:[%s1 + $0xf0] sm:$0xff]
    %v48 = vld [vmem:[%s1 + $0xf8] sm:$0xff]
    %v49 = vld [vmem:[%s1 + $0x100] sm:$0xff]
    %v50 = vld [vmem:[%s1 + $0x108] sm:$0xff]
    %v51 = vld [vmem:[%s1 + $0x110] sm:$0xff]
    %v52 = vld [vmem:[%s1 + $0x118] sm:$0xff]
    %v53 = vld [vmem:[%s1 + $0x120] sm:$0xff]
    %v54 = vld [vmem:[%s1 + $0x128] sm:$0xff]
    %v55 = vld [vmem:[%s1 + $0x130] sm:$0xff]
    %v56 = vld [vmem:[%s1 + $0x138] sm:$0xff]
    %v57 = vld [vmem:[%s1 + $0x140] sm:$0xff]
    %v58 = vld [vmem:[%s1 + $0x148] sm:$0xff]
    %v59 = vld [vmem:[%s1 + $0x150] sm:$0xff]
    %v60 = vld [vmem:[%s1 + $0x158] sm:$0xff]
    %v61 = vld [vmem:[%s1 + $0x160] sm:$0xff]
    %v62 = vld [vmem:[%s1 + $0x168] sm:$0xff]
    %v63 = vld [vmem:[%s1 + $0x170] sm:$0xff]
    %v64 = vld [vmem:[%s1 + $0x178] sm:$0xff]
    %v65 = vld [vmem:[%s1 + $0x180] sm:$0xff]
    %v66 = vld [vmem:[%s1 + $0x188] sm:$0xff]
    %v67 = vld [vmem:[%s1 + $0x190] sm:$0xff]
    %v68 = vld [vmem:[%s1 + $0x198] sm:$0xff]
    %v69 = vld [vmem:[%s1 + $0x1a0] sm:$0xff]
    %v70 = vld [vmem:[%s1 + $0x1a8] sm:$0xff]
    %v71 = vld [vmem:[%s1 + $0x1b0] sm:$0xff]
    %v72 = vld [vmem:[%s1 + $0x1b8] sm:$0xff]
    %v73 = vld [vmem:[%s1 + $0x1c0] sm:$0xff]
    %v74 = vld [vmem:[%s1 + $0x1c8] sm:$0xff]
    %v75 = vld [vmem:[%s1 + $0x1d0] sm:$0xff]
    %v76 = vld [vmem:[%s1 + $0x1d8] sm:$0xff]
    %v77 = vld [vmem:[%s1 + $0x1e0] sm:$0xff]
    %v78 = vld [vmem:[%s1 + $0x1e8] sm:$0xff]
    %v79 = vld [vmem:[%s1 + $0x1f0] sm:$0xff]
    %v80 = vld [vmem:[%s1 + $0x1f8] sm:$0xff]
    %v81 = vld [vmem:[%s1 + $0x200] sm:$0xff]
    %v82 = vld [vmem:[%s1 + $0x208] sm:$0xff]
    %v83 = vld [vmem:[%s1 + $0x210] sm:$0xff]
    %v84 = vld [vmem:[%s1 + $0x218] sm:$0xff]
    %v85 = vld [vmem:[%s1 + $0x220] sm:$0xff]
    %v86 = vld [vmem:[%s1 + $0x228] sm:$0xff]
    %v87 = vld [vmem:[%s1 + $0x230] sm:$0xff]
    %v88 = vld [vmem:[%s1 + $0x238] sm:$0xff]
    %v89 = vld [vmem:[%s1 + $0x240] sm:$0xff]
    %v90 = vld [vmem:[%s1 + $0x248] sm:$0xff]
    %v91 = vld [vmem:[%s1 + $0x250] sm:$0xff]
    %v92 = vld [vmem:[%s1 + $0x258] sm:$0xff]
    %v93 = vld [vmem:[%s1 + $0x260] sm:$0xff]
    %v94 = vld [vmem:[%s1 + $0x268] sm:$0xff]
    %v95 = vld [vmem:[%s1 + $0x270] sm:$0xff]
    %v96 = vld [vmem:[%s1 + $0x278] sm:$0xff]
    %v97 = vld [vmem:[%s1 + $0x280] sm:$0xff]
    %v98 = vld [vmem:[%s1 + $0x288] sm:$0xff]
    %v99 = vld [vmem:[%s1 + $0x290] sm:$0xff]
    %v100 = vld [vmem:[%s1 + $0x298] sm:$0xff]
    %v101 = vld [vmem:[%s1 + $0x2a0] sm:$0xff]
    %v102 = vld [vmem:[%s1 + $0x2a8] sm:$0xff]
    %v103 = vld [vmem:[%s1 + $0x2b0] sm:$0xff]
    %v104 = vld [vmem:[%s1 + $0x2b8] sm:$0xff]
    %v105 = vld [vmem:[%s1 + $0x2c0] sm:$0xff]
    %v106 = vld [vmem:[%s1 + $0x2c8] sm:$0xff]
    %v107 = vld [vmem:[%s1 + $0x2d0] sm:$0xff]
    %v108 = vld [vmem:[%s1 + $0x2d8] sm:$0xff]
    %v109 = vld [vmem:[%s1 + $0x2e0] sm:$0xff]
    %v110 = vld [vmem:[%s1 + $0x2e8] sm:$0xff]
    %v111 = vld [vmem:[%s1 + $0x2f0] sm:$0xff]
    %v112 = vld [vmem:[%s1 + $0x2f8] sm:$0xff]
    %v113 = vld [vmem:[%s1 + $0x300] sm:$0xff]
    %v114 = vld [vmem:[%s1 + $0x308] sm:$0xff]
    %v115 = vld [vmem:[%s1 + $0x310] sm:$0xff]
    %v116 = vld [vmem:[%s1 + $0x318] sm:$0xff]
    %v117 = vld [vmem:[%s1 + $0x320] sm:$0xff]
    %v118 = vld [vmem:[%s1 + $0x328] sm:$0xff]
    %v119 = vld [vmem:[%s1 + $0x330] sm:$0xff]
    %v120 = vld [vmem:[%s1 + $0x338] sm:$0xff]
    %v121 = vld [vmem:[%s1 + $0x340] sm:$0xff]
    %v122 = vld [vmem:[%s1 + $0x348] sm:$0xff]
    %v123 = vld [vmem:[%s1 + $0x350] sm:$0xff]
    %v124 = vld [vmem:[%s1 + $0x358] sm:$0xff]
    %v125 = vld [vmem:[%s1 + $0x360] sm:$0xff]
    %v126 = vld [vmem:[%s1 + $0x368] sm:$0xff]
    %v127 = vld [vmem:[%s1 + $0x370] sm:$0xff]
    %v128 = vld [vmem:[%s1 + $0x378] sm:$0xff]
    %v129 = vld [vmem:[%s1 + $0x380] sm:$0xff]
    %v130 = vld [vmem:[%s1 + $0x388] sm:$0xff]
    %v131 = vld [vmem:[%s1 + $0x390] sm:$0xff]
    %v132 = vld [vmem:[%s1 + $0x398] sm:$0xff]
    %v133 = vld [vmem:[%s1 + $0x3a0] sm:$0xff]
    %v134 = vld [vmem:[%s1 + $0x3a8] sm:$0xff]
    %v135 = vld [vmem:[%s1 + $0x3b0] sm:$0xff]
    %v136 = vld [vmem:[%s1 + $0x3b8] sm:$0xff]
    %v137 = vld [vmem:[%s1 + $0x3c0] sm:$0xff]
    %v138 = vld [vmem:[%s1 + $0x3c8] sm:$0xff]
    %v139 = vld [vmem:[%s1 + $0x3d0] sm:$0xff]
    %v140 = vld [vmem:[%s1 + $0x3d8] sm:$0xff]
    %v141 = vld [vmem:[%s1 + $0x3e0] sm:$0xff]
    %v142 = vld [vmem:[%s1 + $0x3e8] sm:$0xff]
    %v143 = vld [vmem:[%s1 + $0x3f0] sm:$0xff]
    %v144 = vld [vmem:[%s1 + $0x3f8] sm:$0xff]
    %v145 = vld [vmem:[%s2] sm:$0x1]
    %v147 = vlaneseq
    %v148 = vshrl.u32 %v147, 7
    %v149 = vsub.s32 0, %v148
    %v150 = vrot.slane %v145, %v149
    %v154 = vcombine.high %v15, %v15
    %v156 = vunpack.c.l.s4 1983009808
    %v157 = vunpack.c.0.s8 %v156
    %v158 = vlaneseq
    %v159 = vshrl.u32 %v158, 7
    %v160 = vsub.s32 %v157, %v159
    %v161 = vrot.slane %v15, %v160
    %v163 = vunpack.c.l.s4 1983009808
    %v164 = vunpack.c.0.s8 %v163
    %v165 = vlaneseq
    %v166 = vshrl.u32 %v165, 7
    %v167 = vsub.s32 %v164, %v166
    %v168 = vrot.slane %v154, %v167
    %v169 = vcombine.high %v161, %v161
    %v170 = vcombine.high %v168, %v168
    %v171 = vcombine.high %v16, %v16
    %v173 = vunpack.c.l.s4 1983009808
    %v174 = vunpack.c.0.s8 %v173
    %v175 = vlaneseq
    %v176 = vshrl.u32 %v175, 7
    %v177 = vsub.s32 %v174, %v176
    %v178 = vrot.slane %v16, %v177
    %v180 = vunpack.c.l.s4 1983009808
    %v181 = vunpack.c.0.s8 %v180
    %v182 = vlaneseq
    %v183 = vshrl.u32 %v182, 7
    %v184 = vsub.s32 %v181, %v183
    %v185 = vrot.slane %v171, %v184
    %v186 = vcombine.high %v178, %v178
    %v187 = vcombine.high %v185, %v185
    %196 = vmatprep.subr.mxu0 0.0
    %197 = vmatpush1.msra.mxu0 %v17
    %198 = vmatprep.subr.mxu0 0.0
    %199 = vmatpush1.msra.mxu0 %v18
    %200 = vmatprep.subr.mxu0 0.0
    %201 = vmatpush1.msra.mxu0 %v19
    %202 = vmatprep.subr.mxu0 0.0
    %203 = vmatpush1.msra.mxu0 %v20
    %204 = vmatprep.subr.mxu0 0.0
    %205 = vmatpush1.msra.mxu0 %v21
    %206 = vmatprep.subr.mxu0 0.0
    %207 = vmatpush1.msra.mxu0 %v22
    %208 = vmatprep.subr.mxu0 0.0
    %209 = vmatpush1.msra.mxu0 %v23
    %210 = vmatprep.subr.mxu0 0.0
    %211 = vmatpush1.msra.mxu0 %v24
    %212 = vmatprep.subr.mxu0 0.0
    %213 = vmatpush1.msra.mxu0 %v25
    %214 = vmatprep.subr.mxu0 0.0
    %215 = vmatpush1.msra.mxu0 %v26
    %216 = vmatprep.subr.mxu0 0.0
    %217 = vmatpush1.msra.mxu0 %v27
    %218 = vmatprep.subr.mxu0 0.0
    %219 = vmatpush1.msra.mxu0 %v28
    %220 = vmatprep.subr.mxu0 0.0
    %221 = vmatpush1.msra.mxu0 %v29
    %222 = vmatprep.subr.mxu0 0.0
    %223 = vmatpush1.msra.mxu0 %v30
    %224 = vmatprep.subr.mxu0 0.0
    %225 = vmatpush1.msra.mxu0 %v31
    %226 = vmatprep.subr.mxu0 0.0
    %227 = vmatpush1.msra.mxu0 %v32
    %228 = vmatprep.subr.mxu0 0.0
    %229 = vmatpush1.msra.mxu0 %v33
    %230 = vmatprep.subr.mxu0 0.0
    %231 = vmatpush1.msra.mxu0 %v34
    %232 = vmatprep.subr.mxu0 0.0
    %233 = vmatpush1.msra.mxu0 %v35
    %234 = vmatprep.subr.mxu0 0.0
    %235 = vmatpush1.msra.mxu0 %v36
    %236 = vmatprep.subr.mxu0 0.0
    %237 = vmatpush1.msra.mxu0 %v37
    %238 = vmatprep.subr.mxu0 0.0
    %239 = vmatpush1.msra.mxu0 %v38
    %240 = vmatprep.subr.mxu0 0.0
    %241 = vmatpush1.msra.mxu0 %v39
    %242 = vmatprep.subr.mxu0 0.0
    %243 = vmatpush1.msra.mxu0 %v40
    %244 = vmatprep.subr.mxu0 0.0
    %245 = vmatpush1.msra.mxu0 %v41
    %246 = vmatprep.subr.mxu0 0.0
    %247 = vmatpush1.msra.mxu0 %v42
    %248 = vmatprep.subr.mxu0 0.0
    %249 = vmatpush1.msra.mxu0 %v43
    %250 = vmatprep.subr.mxu0 0.0
    %251 = vmatpush1.msra.mxu0 %v44
    %252 = vmatprep.subr.mxu0 0.0
    %253 = vmatpush1.msra.mxu0 %v45
    %254 = vmatprep.subr.mxu0 0.0
    %255 = vmatpush1.msra.mxu0 %v46
    %256 = vmatprep.subr.mxu0 0.0
    %257 = vmatpush1.msra.mxu0 %v47
    %258 = vmatprep.subr.mxu0 0.0
    %259 = vmatpush1.msra.mxu0 %v48
    %260 = vmatprep.mubr.f32.mxu0 %v169
    %261 = vmatmul.mubr.f32.gmra.mrb[0].mxu0 %v161
    %v262 = vpop.f32.mrb[0].mxu0
    %v263 = vadd.f32 %v150, %v262
    %v264 = vpop.f32.mrb[0].mxu0
    %265 = vdwg.mxu0
    %266 = vmatprep.subr.mxu0 0.0
    %267 = vmatpush1.msra.mxu0 %v49
    %268 = vmatprep.subr.mxu0 0.0
    %269 = vmatpush1.msra.mxu0 %v50
    %270 = vmatprep.subr.mxu0 0.0
    %271 = vmatpush1.msra.mxu0 %v51
    %272 = vmatprep.subr.mxu0 0.0
    %273 = vmatpush1.msra.mxu0 %v52
    %274 = vmatprep.subr.mxu0 0.0
    %275 = vmatpush1.msra.mxu0 %v53
    %276 = vmatprep.subr.mxu0 0.0
    %277 = vmatpush1.msra.mxu0 %v54
    %278 = vmatprep.subr.mxu0 0.0
    %279 = vmatpush1.msra.mxu0 %v55
    %280 = vmatprep.subr.mxu0 0.0
    %281 = vmatpush1.msra.mxu0 %v56
    %282 = vmatprep.subr.mxu0 0.0
    %283 = vmatpush1.msra.mxu0 %v57
    %284 = vmatprep.subr.mxu0 0.0
    %285 = vmatpush1.msra.mxu0 %v58
    %286 = vmatprep.subr.mxu0 0.0
    %287 = vmatpush1.msra.mxu0 %v59
    %288 = vmatprep.subr.mxu0 0.0
    %289 = vmatpush1.msra.mxu0 %v60
    %290 = vmatprep.subr.mxu0 0.0
    %291 = vmatpush1.msra.mxu0 %v61
    %292 = vmatprep.subr.mxu0 0.0
    %293 = vmatpush1.msra.mxu0 %v62
    %294 = vmatprep.subr.mxu0 0.0
    %295 = vmatpush1.msra.mxu0 %v63
    %296 = vmatprep.subr.mxu0 0.0
    %297 = vmatpush1.msra.mxu0 %v64
    %298 = vmatprep.subr.mxu0 0.0
    %299 = vmatpush1.msra.mxu0 %v65
    %300 = vmatprep.subr.mxu0 0.0
    %301 = vmatpush1.msra.mxu0 %v66
    %302 = vmatprep.subr.mxu0 0.0
    %303 = vmatpush1.msra.mxu0 %v67
    %304 = vmatprep.subr.mxu0 0.0
    %305 = vmatpush1.msra.mxu0 %v68
    %306 = vmatprep.subr.mxu0 0.0
    %307 = vmatpush1.msra.mxu0 %v69
    %308 = vmatprep.subr.mxu0 0.0
    %309 = vmatpush1.msra.mxu0 %v70
    %310 = vmatprep.subr.mxu0 0.0
    %311 = vmatpush1.msra.mxu0 %v71
    %312 = vmatprep.subr.mxu0 0.0
    %313 = vmatpush1.msra.mxu0 %v72
    %314 = vmatprep.subr.mxu0 0.0
    %315 = vmatpush1.msra.mxu0 %v73
    %316 = vmatprep.subr.mxu0 0.0
    %317 = vmatpush1.msra.mxu0 %v74
    %318 = vmatprep.subr.mxu0 0.0
    %319 = vmatpush1.msra.mxu0 %v75
    %320 = vmatprep.subr.mxu0 0.0
    %321 = vmatpush1.msra.mxu0 %v76
    %322 = vmatprep.subr.mxu0 0.0
    %323 = vmatpush1.msra.mxu0 %v77
    %324 = vmatprep.subr.mxu0 0.0
    %325 = vmatpush1.msra.mxu0 %v78
    %326 = vmatprep.subr.mxu0 0.0
    %327 = vmatpush1.msra.mxu0 %v79
    %328 = vmatprep.subr.mxu0 0.0
    %329 = vmatpush1.msra.mxu0 %v80
    %330 = vmatprep.mubr.f32.mxu0 %v170
    %331 = vmatmul.mubr.f32.gmra.mrb[0].mxu0 %v168
    %v332 = vpop.f32.mrb[0].mxu0
    %v333 = vadd.f32 %v263, %v332
    %v334 = vpop.f32.mrb[0].mxu0
    %335 = vdwg.mxu0
    %336 = vmatprep.subr.mxu0 0.0
    %337 = vmatpush1.msra.mxu0 %v81
    %338 = vmatprep.subr.mxu0 0.0
    %339 = vmatpush1.msra.mxu0 %v82
    %340 = vmatprep.subr.mxu0 0.0
    %341 = vmatpush1.msra.mxu0 %v83
    %342 = vmatprep.subr.mxu0 0.0
    %343 = vmatpush1.msra.mxu0 %v84
    %344 = vmatprep.subr.mxu0 0.0
    %345 = vmatpush1.msra.mxu0 %v85
    %346 = vmatprep.subr.mxu0 0.0
    %347 = vmatpush1.msra.mxu0 %v86
    %348 = vmatprep.subr.mxu0 0.0
    %349 = vmatpush1.msra.mxu0 %v87
    %350 = vmatprep.subr.mxu0 0.0
    %351 = vmatpush1.msra.mxu0 %v88
    %352 = vmatprep.subr.mxu0 0.0
    %353 = vmatpush1.msra.mxu0 %v89
    %354 = vmatprep.subr.mxu0 0.0
    %355 = vmatpush1.msra.mxu0 %v90
    %356 = vmatprep.subr.mxu0 0.0
    %357 = vmatpush1.msra.mxu0 %v91
    %358 = vmatprep.subr.mxu0 0.0
    %359 = vmatpush1.msra.mxu0 %v92
    %360 = vmatprep.subr.mxu0 0.0
    %361 = vmatpush1.msra.mxu0 %v93
    %362 = vmatprep.subr.mxu0 0.0
    %363 = vmatpush1.msra.mxu0 %v94
    %364 = vmatprep.subr.mxu0 0.0
    %365 = vmatpush1.msra.mxu0 %v95
    %366 = vmatprep.subr.mxu0 0.0
    %367 = vmatpush1.msra.mxu0 %v96
    %368 = vmatprep.subr.mxu0 0.0
    %369 = vmatpush1.msra.mxu0 %v97
    %370 = vmatprep.subr.mxu0 0.0
    %371 = vmatpush1.msra.mxu0 %v98
    %372 = vmatprep.subr.mxu0 0.0
    %373 = vmatpush1.msra.mxu0 %v99
    %374 = vmatprep.subr.mxu0 0.0
    %375 = vmatpush1.msra.mxu0 %v100
    %376 = vmatprep.subr.mxu0 0.0
    %377 = vmatpush1.msra.mxu0 %v101
    %378 = vmatprep.subr.mxu0 0.0
    %379 = vmatpush1.msra.mxu0 %v102
    %380 = vmatprep.subr.mxu0 0.0
    %381 = vmatpush1.msra.mxu0 %v103
    %382 = vmatprep.subr.mxu0 0.0
    %383 = vmatpush1.msra.mxu0 %v104
    %384 = vmatprep.subr.mxu0 0.0
    %385 = vmatpush1.msra.mxu0 %v105
    %386 = vmatprep.subr.mxu0 0.0
    %387 = vmatpush1.msra.mxu0 %v106
    %388 = vmatprep.subr.mxu0 0.0
    %389 = vmatpush1.msra.mxu0 %v107
    %390 = vmatprep.subr.mxu0 0.0
    %391 = vmatpush1.msra.mxu0 %v108
    %392 = vmatprep.subr.mxu0 0.0
    %393 = vmatpush1.msra.mxu0 %v109
    %394 = vmatprep.subr.mxu0 0.0
    %395 = vmatpush1.msra.mxu0 %v110
    %396 = vmatprep.subr.mxu0 0.0
    %397 = vmatpush1.msra.mxu0 %v111
    %398 = vmatprep.subr.mxu0 0.0
    %399 = vmatpush1.msra.mxu0 %v112
    %400 = vmatprep.mubr.f32.mxu0 %v186
    %401 = vmatmul.mubr.f32.gmra.mrb[0].mxu0 %v178
    %v402 = vpop.f32.mrb[0].mxu0
    %v403 = vadd.f32 %v333, %v402
    %v404 = vpop.f32.mrb[0].mxu0
    %405 = vdwg.mxu0
    %406 = vmatprep.subr.mxu0 0.0
    %407 = vmatpush1.msra.mxu0 %v113
    %408 = vmatprep.subr.mxu0 0.0
    %409 = vmatpush1.msra.mxu0 %v114
    %410 = vmatprep.subr.mxu0 0.0
    %411 = vmatpush1.msra.mxu0 %v115
    %412 = vmatprep.subr.mxu0 0.0
    %413 = vmatpush1.msra.mxu0 %v116
    %414 = vmatprep.subr.mxu0 0.0
    %415 = vmatpush1.msra.mxu0 %v117
    %416 = vmatprep.subr.mxu0 0.0
    %417 = vmatpush1.msra.mxu0 %v118
    %418 = vmatprep.subr.mxu0 0.0
    %419 = vmatpush1.msra.mxu0 %v119
    %420 = vmatprep.subr.mxu0 0.0
    %421 = vmatpush1.msra.mxu0 %v120
    %422 = vmatprep.subr.mxu0 0.0
    %423 = vmatpush1.msra.mxu0 %v121
    %424 = vmatprep.subr.mxu0 0.0
    %425 = vmatpush1.msra.mxu0 %v122
    %426 = vmatprep.subr.mxu0 0.0
    %427 = vmatpush1.msra.mxu0 %v123
    %428 = vmatprep.subr.mxu0 0.0
    %429 = vmatpush1.msra.mxu0 %v124
    %430 = vmatprep.subr.mxu0 0.0
    %431 = vmatpush1.msra.mxu0 %v125
    %432 = vmatprep.subr.mxu0 0.0
    %433 = vmatpush1.msra.mxu0 %v126
    %434 = vmatprep.subr.mxu0 0.0
    %435 = vmatpush1.msra.mxu0 %v127
    %436 = vmatprep.subr.mxu0 0.0
    %437 = vmatpush1.msra.mxu0 %v128
    %438 = vmatprep.subr.mxu0 0.0
    %439 = vmatpush1.msra.mxu0 %v129
    %440 = vmatprep.subr.mxu0 0.0
    %441 = vmatpush1.msra.mxu0 %v130
    %442 = vmatprep.subr.mxu0 0.0
    %443 = vmatpush1.msra.mxu0 %v131
    %444 = vmatprep.subr.mxu0 0.0
    %445 = vmatpush1.msra.mxu0 %v132
    %446 = vmatprep.subr.mxu0 0.0
    %447 = vmatpush1.msra.mxu0 %v133
    %448 = vmatprep.subr.mxu0 0.0
    %449 = vmatpush1.msra.mxu0 %v134
    %450 = vmatprep.subr.mxu0 0.0
    %451 = vmatpush1.msra.mxu0 %v135
    %452 = vmatprep.subr.mxu0 0.0
    %453 = vmatpush1.msra.mxu0 %v136
    %454 = vmatprep.subr.mxu0 0.0
    %455 = vmatpush1.msra.mxu0 %v137
    %456 = vmatprep.subr.mxu0 0.0
    %457 = vmatpush1.msra.mxu0 %v138
    %458 = vmatprep.subr.mxu0 0.0
    %459 = vmatpush1.msra.mxu0 %v139
    %460 = vmatprep.subr.mxu0 0.0
    %461 = vmatpush1.msra.mxu0 %v140
    %462 = vmatprep.subr.mxu0 0.0
    %463 = vmatpush1.msra.mxu0 %v141
    %464 = vmatprep.subr.mxu0 0.0
    %465 = vmatpush1.msra.mxu0 %v142
    %466 = vmatprep.subr.mxu0 0.0
    %467 = vmatpush1.msra.mxu0 %v143
    %468 = vmatprep.subr.mxu0 0.0
    %469 = vmatpush1.msra.mxu0 %v144
    %470 = vmatprep.mubr.f32.mxu0 %v187
    %471 = vmatmul.mubr.f32.gmra.mrb[0].mxu0 %v185
    %v472 = vpop.f32.mrb[0].mxu0
    %v473 = vadd.f32 %v403, %v472
    %v474 = vpop.f32.mrb[0].mxu0
    %475 = vdwg.mxu0
    %vm476 = vcmask 58368
    %v477 = vsel %vm476, %v473, -inf
    %478 = vmax.xlane.f32.xlu0 %v477
    %v479 = vpop.xlane.xlu0 %478
    %v480 = vsub.f32 %v473, %v479
    %v481 = vmul.f32 %v480, 1.442695
    %v482 = vpow.pop %v481
    %v483 = vsel %vm476, %v482, 0.0
    %484 = vadd.xlane.f32.xlu0 %v483
    %v485 = vpop.xlane.xlu0 %484
    %v486 = vrcp.pop %v485
    %v487 = vmul.f32 %v482, %v486
    %488 = vst.msk [vmem:[#allocation2] sm:$0x3] %vm476, %v487
    // Predicated region
    $region14: #{tpu_custom_call.1} parent=1 // pred_check
      _
    $region15: #{tpu_custom_call.1} parent=1 // pred_check_branch
      %490 = sbr.rel (0) target = $region17
    $region16: #{tpu_custom_call.1} parent=1 // pred_region
      %s492 = ssub.s32 32, 32
      %493 = vsyncadd [#allocation3], %s492
      %s495 = sshll.u32 [#allocation2], 4
      %s496 = int_to_ptr.vmem [resolvable:$true] %s495
      %498 = dma.vmem_to_hbm [thread:$0]  %s496, 32, %s3, [#allocation3]
    $region17: #{tpu_custom_call.1} parent=1 // pred_fallthru
      _
    // Predicated region
    $region18: #{tpu_custom_call.1} parent=1 // pred_check
      _
    $region19: #{tpu_custom_call.1} parent=1 // pred_check_branch
      %500 = sbr.rel (0) target = $region21
    $region20: #{tpu_custom_call.1} parent=1 // pred_region
      %501 = dma.done [#allocation3], 32
    $region21: #{tpu_custom_call.1} parent=1 // pred_fallthru
      _
    %502 = vsyncpa [#allocation3], 1

</llo_original>
